<compile_context>
chip_gen: v5e
topology: v5e:2x2
jax: 0.10.0
libtpu: 0.0.40
codegen_flags: <defaults>
</compile_context>

<pallas_src>
import functools
import math

import jax
import jax.numpy as jnp
import numpy as np
from jax import lax
from jax.experimental import pallas as pl
from jax.experimental.pallas import tpu as pltpu

NEG_INF = -1.0e30  # finite stand-in for -inf (safe under exp/add in f32)


def _round_up(x, m):
    return ((x + m - 1) // m) * m


def _ctc_alpha_kernel(il_ref, lp_ref, skip_ref, final_ref, out_ref, alpha_ref,
                      *, unroll):
    """Grid = (batch_tiles, time_blocks).  One grid step advances TB frames.

    il_ref    : (Bt, 1)         f32 input lengths (frames >= il are frozen)
    lp_ref    : (TB, Bt, S_pad) pre-gathered log p(label_s) per frame
    skip_ref  : (Bt, S_pad)     additive mask: 0 where the s-2 skip is legal
    final_ref : (Bt, S_pad)     additive mask selecting the two legal final states
    out_ref   : (Bt, 128)       per-utterance scores, lane-broadcast
    alpha_ref : (Bt, S_pad)     scratch carrying alpha across time blocks
    """
    ti = pl.program_id(1)
    n_t = pl.num_programs(1)
    TB = lp_ref.shape[0]
    Bt, S_pad = alpha_ref.shape

    # hoisted per-grid-step constants (outside the frame loop)
    lane = lax.broadcasted_iota(jnp.int32, (Bt, S_pad), 1)
    a1_mask = jnp.where(lane >= 1, 0.0, NEG_INF).astype(jnp.float32)
    skip = skip_ref[...]
    il = il_ref[...]                                        # (Bt, 1)

    @pl.when(ti == 0)
    def _init():
        # "virtual t = -1" state: running frame 0 through the recursion below
        # reproduces the standard CTC init alpha[0, {0,1}] = lp exactly.
        alpha_ref[...] = jnp.where(lane == 0, 0.0, NEG_INF).astype(jnp.float32)

    t_base = (ti * TB).astype(jnp.float32)

    def frame(i, alpha):
        lp_t = lp_ref[i]                                    # (Bt, S_pad)
        a1 = pltpu.roll(alpha, shift=1, axis=1) + a1_mask   # alpha[t-1, s-1]
        a2 = pltpu.roll(alpha, shift=2, axis=1) + skip      # alpha[t-1, s-2]
        m = jnp.maximum(jnp.maximum(alpha, a1), a2)
        lse = m + jnp.log(jnp.exp(alpha - m) + jnp.exp(a1 - m) + jnp.exp(a2 - m))
        new = lse + lp_t
        active = (t_base + i.astype(jnp.float32)) < il      # (Bt, 1) freeze pad
        return jnp.where(active, new, alpha)

    alpha = alpha_ref[...]
    alpha = lax.fori_loop(0, TB, frame, alpha, unroll=unroll)
    alpha_ref[...] = alpha

    @pl.when(ti == n_t - 1)
    def _finalize():
        scored = alpha + final_ref[...]                     # (Bt, S_pad)
        m = jnp.max(scored, axis=1, keepdims=True)
        sc = m + jnp.log(jnp.sum(jnp.exp(scored - m), axis=1, keepdims=True))
        out_ref[...] = jnp.broadcast_to(sc, out_ref.shape)  # lane-dense store


def k2_ctc_loss_pallas(log_probs, targets, input_lengths, target_lengths,
                       *, time_block=128, batch_tile=8):
    """log_probs: (T, B, C) f32 log-softmax (blank == class 0); targets: flat labels."""
    log_probs = jnp.asarray(log_probs, dtype=jnp.float32)
    T, B, C = log_probs.shape
    tl = np.asarray(target_lengths, dtype=np.int64)
    il = np.asarray(input_lengths, dtype=np.int64)
    tgts = np.asarray(targets, dtype=np.int64)

    Lmax = max(int(tl.max()), 1)
    S = 2 * Lmax + 1
    S_pad = _round_up(S, 128)           # lane-aligned lattice width
    B_pad = _round_up(B, batch_tile)    # sublane-aligned batch
    TB = max(1, min(int(time_block), T))
    T_pad = _round_up(T, TB)

    # --- host-side glue (one-time setup, no hot-path compute) ------------------
    # extended (blank-interleaved) labels, padded to S_pad
    ext = np.zeros((B, S_pad), dtype=np.int32)
    off = 0
    for b in range(B):
        l = int(tl[b])
        ext[b, 1:2 * l:2] = tgts[off:off + l]
        off += l

    skip = np.full((B_pad, S_pad), NEG_INF, dtype=np.float32)
    final = np.full((B_pad, S_pad), NEG_INF, dtype=np.float32)
    for b in range(B):
        Sb = 2 * int(tl[b]) + 1
        for s in range(2, Sb):
            if ext[b, s] != 0 and ext[b, s] != ext[b, s - 2]:
                skip[b, s] = 0.0
        final[b, Sb - 1] = 0.0
        if Sb >= 2:
            final[b, Sb - 2] = 0.0

    il_arr = np.zeros((B_pad, 1), dtype=np.float32)
    il_arr[:B, 0] = il.astype(np.float32)     # padded rows get il=0 (frozen)

    # one-time label gather (XLA op): lp_ext[t, b, s] = log_probs[t, b, ext[b, s]]
    lp_ext = jnp.take_along_axis(log_probs, jnp.asarray(ext)[None, :, :], axis=2)
    lp_ext = jnp.pad(lp_ext, ((0, T_pad - T), (0, B_pad - B), (0, 0)))

    n_b = B_pad // batch_tile
    n_t = T_pad // TB
    unroll = 8 if TB >= 8 else True

    out = pl.pallas_call(
        functools.partial(_ctc_alpha_kernel, unroll=unroll),
        out_shape=jax.ShapeDtypeStruct((B_pad, 128), jnp.float32),
        grid_spec=pltpu.PrefetchScalarGridSpec(
            num_scalar_prefetch=0,
            grid=(n_b, n_t),
            in_specs=[
                pl.BlockSpec((batch_tile, 1), lambda bi, ti: (bi, 0)),          # il
                pl.BlockSpec((TB, batch_tile, S_pad), lambda bi, ti: (ti, bi, 0)),  # lp_ext
                pl.BlockSpec((batch_tile, S_pad), lambda bi, ti: (bi, 0)),      # skip
                pl.BlockSpec((batch_tile, S_pad), lambda bi, ti: (bi, 0)),      # final
            ],
            out_specs=pl.BlockSpec((batch_tile, 128), lambda bi, ti: (bi, 0)),
            scratch_shapes=[pltpu.VMEM((batch_tile, S_pad), jnp.float32)],
        ),
        compiler_params=pltpu.CompilerParams(
            dimension_semantics=("parallel", "arbitrary")),
    )(jnp.asarray(il_arr), lp_ext, jnp.asarray(skip), jnp.asarray(final))

    scores = out[:B, 0]
    finite = scores > (0.5 * NEG_INF)   # mirrors torch.ne(tot_scores, -inf)
    return -jnp.sum(jnp.where(finite, scores, 0.0))


def _ctc_loss_reference(log_probs, targets, input_lengths, target_lengths):
    """Pure-numpy CTC forward (log semiring), float64, for validation."""
    lp = np.asarray(log_probs, dtype=np.float64)
    T, B, C = lp.shape
    tl = np.asarray(target_lengths, dtype=np.int64)
    il = np.asarray(input_lengths, dtype=np.int64)
    tgts = np.asarray(targets, dtype=np.int64)

    def lse(vals):
        vals = [v for v in vals if v != -math.inf]
        if not vals:
            return -math.inf
        m = max(vals)
        return m + math.log(sum(math.exp(v - m) for v in vals))

    total = 0.0
    off = 0
    for b in range(B):
        L = int(tl[b]); Tb = int(il[b])
        y = tgts[off:off + L]; off += L
        ext = np.zeros(2 * L + 1, dtype=np.int64)
        ext[1::2] = y
        S = 2 * L + 1
        alpha = np.full(S, -math.inf)
        alpha[0] = lp[0, b, ext[0]]
        if S > 1:
            alpha[1] = lp[0, b, ext[1]]
        for t in range(1, Tb):
            new = np.full(S, -math.inf)
            for s in range(S):
                cands = [alpha[s]]
                if s >= 1:
                    cands.append(alpha[s - 1])
                if s >= 2 and ext[s] != 0 and ext[s] != ext[s - 2]:
                    cands.append(alpha[s - 2])
                v = lse(cands)
                new[s] = v + lp[t, b, ext[s]] if v != -math.inf else -math.inf
            alpha = new
        score = lse([alpha[S - 1]] + ([alpha[S - 2]] if S >= 2 else []))
        if score != -math.inf:          # get_tot_objf_and_num_frames finite filter
            total += score
    return -total


if __name__ == "__main__":
    key = jax.random.PRNGKey(0)
    k1, k2_, k3, k4 = jax.random.split(key, 4)

    # Case 1: tiny shapes (exercises S/B padding).  B=2, T=8, C=6 (blank=0).
    B, T, C = 2, 8, 6
    logits = jax.random.normal(k1, (T, B, C), dtype=jnp.float32)
    log_probs = jax.nn.log_softmax(logits, axis=-1)
    target_lengths = np.array([3, 2], dtype=np.int32)
    input_lengths = np.array([8, 6], dtype=np.int32)
    targets = np.asarray(
        jax.random.randint(k2_, (int(target_lengths.sum()),), 1, C, dtype=jnp.int32))

    loss = jax.block_until_ready(
        k2_ctc_loss_pallas(log_probs, targets, input_lengths, target_lengths))
    ref = _ctc_loss_reference(np.asarray(log_probs), targets, input_lengths,
                              target_lengths)
    assert np.isfinite(float(loss)), float(loss)
    assert abs(float(loss) - ref) < 1e-2 * max(1.0, abs(ref)), (float(loss), ref)

    # Case 2: multiple time blocks + frame padding + frozen (padded) frames.
    B, T, C = 3, 37, 11
    logits = jax.random.normal(k3, (T, B, C), dtype=jnp.float32)
    log_probs = jax.nn.log_softmax(logits, axis=-1)
    target_lengths = np.array([5, 7, 2], dtype=np.int32)
    input_lengths = np.array([37, 30, 18], dtype=np.int32)
    targets = np.asarray(
        jax.random.randint(k4, (int(target_lengths.sum()),), 1, C, dtype=jnp.int32))

    loss = jax.block_until_ready(
        k2_ctc_loss_pallas(log_probs, targets, input_lengths, target_lengths,
                           time_block=16))
    ref = _ctc_loss_reference(np.asarray(log_probs), targets, input_lengths,
                              target_lengths)
    assert np.isfinite(float(loss)), float(loss)
    assert abs(float(loss) - ref) < 1e-2 * max(1.0, abs(ref)), (float(loss), ref)

    print("KERNEL_OK")
</pallas_src>

<mosaic_0001>
module attributes {stable_mosaic.version = 11 : i64} {
  func.func @_ctc_alpha_kernel(%arg0: i32, %arg1: i32, %arg2: memref<8x1xf32, #tpu.memory_space<vmem>>, %arg3: memref<8x8x128xf32, #tpu.memory_space<vmem>>, %arg4: memref<8x128xf32, #tpu.memory_space<vmem>>, %arg5: memref<8x128xf32, #tpu.memory_space<vmem>>, %arg6: memref<8x128xf32, #tpu.memory_space<vmem>>, %arg7: memref<8x128xf32, #tpu.memory_space<vmem>>) attributes {dimension_semantics = [#tpu.dimension_semantics<parallel>, #tpu.dimension_semantics<arbitrary>], iteration_bounds = array<i64: 1, 1>, scalar_prefetch = 0 : i64, scratch_operands = 1 : i64, tpu.core_type = #tpu.core_type<tc>, window_params = [{transform_indices = @transform_0, window_bounds = array<i64: 8, 1>}, {transform_indices = @transform_1, window_bounds = array<i64: 8, 8, 128>}, {transform_indices = @transform_2, window_bounds = array<i64: 8, 128>}, {transform_indices = @transform_3, window_bounds = array<i64: 8, 128>}, {transform_indices = @transform_4, window_bounds = array<i64: 8, 128>}]} {
    %0 = tpu.iota {dimensions = array<i32: 1>} : vector<8x128xi32>
    %c1_i32 = arith.constant 1 : i32
    %1 = vector.broadcast %c1_i32 : i32 to vector<8x128xi32>
    %2 = arith.cmpi sge, %0, %1 : vector<8x128xi32>
    %cst = arith.constant 0.000000e+00 : f32
    %cst_0 = arith.constant -1.000000e+30 : f32
    %3 = vector.broadcast %cst : f32 to vector<8x128xf32>
    %4 = vector.broadcast %cst_0 : f32 to vector<8x128xf32>
    %5 = arith.select %2, %3, %4 : vector<8x128xi1>, vector<8x128xf32>
    %c0 = arith.constant 0 : index
    %c0_1 = arith.constant 0 : index
    %6 = vector.load %arg4[%c0, %c0_1] : memref<8x128xf32, #tpu.memory_space<vmem>>, vector<8x128xf32>
    %c0_2 = arith.constant 0 : index
    %c0_3 = arith.constant 0 : index
    %7 = vector.load %arg2[%c0_2, %c0_3] : memref<8x1xf32, #tpu.memory_space<vmem>>, vector<8x1xf32>
    %c0_i32 = arith.constant 0 : i32
    %8 = arith.cmpi eq, %arg1, %c0_i32 : i32
    %9 = arith.extui %8 : i1 to i32
    %c0_i32_4 = arith.constant 0 : i32
    %10 = arith.cmpi ne, %9, %c0_i32_4 : i32
    scf.if %10 {
      %c0_i32_46 = arith.constant 0 : i32
      %234 = vector.broadcast %c0_i32_46 : i32 to vector<8x128xi32>
      %235 = arith.cmpi eq, %0, %234 : vector<8x128xi32>
      %cst_47 = arith.constant 0.000000e+00 : f32
      %cst_48 = arith.constant -1.000000e+30 : f32
      %236 = vector.broadcast %cst_47 : f32 to vector<8x128xf32>
      %237 = vector.broadcast %cst_48 : f32 to vector<8x128xf32>
      %238 = arith.select %235, %236, %237 : vector<8x128xi1>, vector<8x128xf32>
      %c0_49 = arith.constant 0 : index
      %c0_50 = arith.constant 0 : index
      %239 = vector.load %arg7[%c0_49, %c0_50] : memref<8x128xf32, #tpu.memory_space<vmem>>, vector<8x128xf32>
      tpu.vector_store %arg7[%c0_49, %c0_50], %238 {strides = array<i32>} : memref<8x128xf32, #tpu.memory_space<vmem>>, vector<8x128xf32>,
    } else {
    }
    %c8_i32 = arith.constant 8 : i32
    %11 = arith.muli %arg1, %c8_i32 : i32
    %12 = arith.sitofp %11 : i32 to f32
    %c0_5 = arith.constant 0 : index
    %c0_6 = arith.constant 0 : index
    %13 = vector.load %arg7[%c0_5, %c0_6] : memref<8x128xf32, #tpu.memory_space<vmem>>, vector<8x128xf32>
    %c0_i32_7 = arith.constant 0 : i32
    %14 = arith.index_cast %c0_i32_7 : i32 to index
    %c0_8 = arith.constant 0 : index
    %c0_9 = arith.constant 0 : index
    %15 = vector.load %arg3[%14, %c0_8, %c0_9] : memref<8x8x128xf32, #tpu.memory_space<vmem>>, vector<1x8x128xf32>
    %16 = vector.shape_cast %15 : vector<1x8x128xf32> to vector<8x128xf32>
    %c1_i32_10 = arith.constant 1 : i32
    %17 = tpu.dynamic_rotate %13 by %c1_i32_10 dim 1 : vector<8x128xf32>, i32 -> vector<8x128xf32>
    %18 = arith.addf %17, %5 : vector<8x128xf32>
    %c2_i32 = arith.constant 2 : i32
    %19 = tpu.dynamic_rotate %13 by %c2_i32 dim 1 : vector<8x128xf32>, i32 -> vector<8x128xf32>
    %20 = arith.addf %19, %6 : vector<8x128xf32>
    %21 = arith.maximumf %13, %18 : vector<8x128xf32>
    %22 = arith.maximumf %21, %20 : vector<8x128xf32>
    %23 = arith.subf %13, %22 : vector<8x128xf32>
    %24 = math.exp %23 : vector<8x128xf32>
    %25 = arith.subf %18, %22 : vector<8x128xf32>
    %26 = math.exp %25 : vector<8x128xf32>
    %27 = arith.addf %24, %26 : vector<8x128xf32>
    %28 = arith.subf %20, %22 : vector<8x128xf32>
    %29 = math.exp %28 : vector<8x128xf32>
    %30 = arith.addf %27, %29 : vector<8x128xf32>
    %31 = math.log %30 : vector<8x128xf32>
    %32 = arith.addf %22, %31 : vector<8x128xf32>
    %33 = arith.addf %32, %16 : vector<8x128xf32>
    %34 = arith.sitofp %c0_i32_7 : i32 to f32
    %35 = arith.addf %12, %34 : f32
    %36 = vector.broadcast %35 : f32 to vector<8x1xf32>
    %37 = arith.cmpf olt, %36, %7 : vector<8x1xf32>
    %38 = vector.shape_cast %37 : vector<8x1xi1> to vector<8x1xi1>
    %39 = vector.broadcast %38 : vector<8x1xi1> to vector<8x128xi1>
    %40 = arith.select %39, %33, %13 : vector<8x128xi1>, vector<8x128xf32>
    %c1_i32_11 = arith.constant 1 : i32
    %41 = arith.index_cast %c1_i32_11 : i32 to index
    %c0_12 = arith.constant 0 : index
    %c0_13 = arith.constant 0 : index
    %42 = vector.load %arg3[%41, %c0_12, %c0_13] : memref<8x8x128xf32, #tpu.memory_space<vmem>>, vector<1x8x128xf32>
    %43 = vector.shape_cast %42 : vector<1x8x128xf32> to vector<8x128xf32>
    %c1_i32_14 = arith.constant 1 : i32
    %44 = tpu.dynamic_rotate %40 by %c1_i32_14 dim 1 : vector<8x128xf32>, i32 -> vector<8x128xf32>
    %45 = arith.addf %44, %5 : vector<8x128xf32>
    %c2_i32_15 = arith.constant 2 : i32
    %46 = tpu.dynamic_rotate %40 by %c2_i32_15 dim 1 : vector<8x128xf32>, i32 -> vector<8x128xf32>
    %47 = arith.addf %46, %6 : vector<8x128xf32>
    %48 = arith.maximumf %40, %45 : vector<8x128xf32>
    %49 = arith.maximumf %48, %47 : vector<8x128xf32>
    %50 = arith.subf %40, %49 : vector<8x128xf32>
    %51 = math.exp %50 : vector<8x128xf32>
    %52 = arith.subf %45, %49 : vector<8x128xf32>
    %53 = math.exp %52 : vector<8x128xf32>
    %54 = arith.addf %51, %53 : vector<8x128xf32>
    %55 = arith.subf %47, %49 : vector<8x128xf32>
    %56 = math.exp %55 : vector<8x128xf32>
    %57 = arith.addf %54, %56 : vector<8x128xf32>
    %58 = math.log %57 : vector<8x128xf32>
    %59 = arith.addf %49, %58 : vector<8x128xf32>
    %60 = arith.addf %59, %43 : vector<8x128xf32>
    %61 = arith.sitofp %c1_i32_11 : i32 to f32
    %62 = arith.addf %12, %61 : f32
    %63 = vector.broadcast %62 : f32 to vector<8x1xf32>
    %64 = arith.cmpf olt, %63, %7 : vector<8x1xf32>
    %65 = vector.shape_cast %64 : vector<8x1xi1> to vector<8x1xi1>
    %66 = vector.broadcast %65 : vector<8x1xi1> to vector<8x128xi1>
    %67 = arith.select %66, %60, %40 : vector<8x128xi1>, vector<8x128xf32>
    %c2_i32_16 = arith.constant 2 : i32
    %68 = arith.index_cast %c2_i32_16 : i32 to index
    %c0_17 = arith.constant 0 : index
    %c0_18 = arith.constant 0 : index
    %69 = vector.load %arg3[%68, %c0_17, %c0_18] : memref<8x8x128xf32, #tpu.memory_space<vmem>>, vector<1x8x128xf32>
    %70 = vector.shape_cast %69 : vector<1x8x128xf32> to vector<8x128xf32>
    %c1_i32_19 = arith.constant 1 : i32
    %71 = tpu.dynamic_rotate %67 by %c1_i32_19 dim 1 : vector<8x128xf32>, i32 -> vector<8x128xf32>
    %72 = arith.addf %71, %5 : vector<8x128xf32>
    %c2_i32_20 = arith.constant 2 : i32
    %73 = tpu.dynamic_rotate %67 by %c2_i32_20 dim 1 : vector<8x128xf32>, i32 -> vector<8x128xf32>
    %74 = arith.addf %73, %6 : vector<8x128xf32>
    %75 = arith.maximumf %67, %72 : vector<8x128xf32>
    %76 = arith.maximumf %75, %74 : vector<8x128xf32>
    %77 = arith.subf %67, %76 : vector<8x128xf32>
    %78 = math.exp %77 : vector<8x128xf32>
    %79 = arith.subf %72, %76 : vector<8x128xf32>
    %80 = math.exp %79 : vector<8x128xf32>
    %81 = arith.addf %78, %80 : vector<8x128xf32>
    %82 = arith.subf %74, %76 : vector<8x128xf32>
    %83 = math.exp %82 : vector<8x128xf32>
    %84 = arith.addf %81, %83 : vector<8x128xf32>
    %85 = math.log %84 : vector<8x128xf32>
    %86 = arith.addf %76, %85 : vector<8x128xf32>
    %87 = arith.addf %86, %70 : vector<8x128xf32>
    %88 = arith.sitofp %c2_i32_16 : i32 to f32
    %89 = arith.addf %12, %88 : f32
    %90 = vector.broadcast %89 : f32 to vector<8x1xf32>
    %91 = arith.cmpf olt, %90, %7 : vector<8x1xf32>
    %92 = vector.shape_cast %91 : vector<8x1xi1> to vector<8x1xi1>
    %93 = vector.broadcast %92 : vector<8x1xi1> to vector<8x128xi1>
    %94 = arith.select %93, %87, %67 : vector<8x128xi1>, vector<8x128xf32>
    %c3_i32 = arith.constant 3 : i32
    %95 = arith.index_cast %c3_i32 : i32 to index
    %c0_21 = arith.constant 0 : index
    %c0_22 = arith.constant 0 : index
    %96 = vector.load %arg3[%95, %c0_21, %c0_22] : memref<8x8x128xf32, #tpu.memory_space<vmem>>, vector<1x8x128xf32>
    %97 = vector.shape_cast %96 : vector<1x8x128xf32> to vector<8x128xf32>
    %c1_i32_23 = arith.constant 1 : i32
    %98 = tpu.dynamic_rotate %94 by %c1_i32_23 dim 1 : vector<8x128xf32>, i32 -> vector<8x128xf32>
    %99 = arith.addf %98, %5 : vector<8x128xf32>
    %c2_i32_24 = arith.constant 2 : i32
    %100 = tpu.dynamic_rotate %94 by %c2_i32_24 dim 1 : vector<8x128xf32>, i32 -> vector<8x128xf32>
    %101 = arith.addf %100, %6 : vector<8x128xf32>
    %102 = arith.maximumf %94, %99 : vector<8x128xf32>
    %103 = arith.maximumf %102, %101 : vector<8x128xf32>
    %104 = arith.subf %94, %103 : vector<8x128xf32>
    %105 = math.exp %104 : vector<8x128xf32>
    %106 = arith.subf %99, %103 : vector<8x128xf32>
    %107 = math.exp %106 : vector<8x128xf32>
    %108 = arith.addf %105, %107 : vector<8x128xf32>
    %109 = arith.subf %101, %103 : vector<8x128xf32>
    %110 = math.exp %109 : vector<8x128xf32>
    %111 = arith.addf %108, %110 : vector<8x128xf32>
    %112 = math.log %111 : vector<8x128xf32>
    %113 = arith.addf %103, %112 : vector<8x128xf32>
    %114 = arith.addf %113, %97 : vector<8x128xf32>
    %115 = arith.sitofp %c3_i32 : i32 to f32
    %116 = arith.addf %12, %115 : f32
    %117 = vector.broadcast %116 : f32 to vector<8x1xf32>
    %118 = arith.cmpf olt, %117, %7 : vector<8x1xf32>
    %119 = vector.shape_cast %118 : vector<8x1xi1> to vector<8x1xi1>
    %120 = vector.broadcast %119 : vector<8x1xi1> to vector<8x128xi1>
    %121 = arith.select %120, %114, %94 : vector<8x128xi1>, vector<8x128xf32>
    %c4_i32 = arith.constant 4 : i32
    %122 = arith.index_cast %c4_i32 : i32 to index
    %c0_25 = arith.constant 0 : index
    %c0_26 = arith.constant 0 : index
    %123 = vector.load %arg3[%122, %c0_25, %c0_26] : memref<8x8x128xf32, #tpu.memory_space<vmem>>, vector<1x8x128xf32>
    %124 = vector.shape_cast %123 : vector<1x8x128xf32> to vector<8x128xf32>
    %c1_i32_27 = arith.constant 1 : i32
    %125 = tpu.dynamic_rotate %121 by %c1_i32_27 dim 1 : vector<8x128xf32>, i32 -> vector<8x128xf32>
    %126 = arith.addf %125, %5 : vector<8x128xf32>
    %c2_i32_28 = arith.constant 2 : i32
    %127 = tpu.dynamic_rotate %121 by %c2_i32_28 dim 1 : vector<8x128xf32>, i32 -> vector<8x128xf32>
    %128 = arith.addf %127, %6 : vector<8x128xf32>
    %129 = arith.maximumf %121, %126 : vector<8x128xf32>
    %130 = arith.maximumf %129, %128 : vector<8x128xf32>
    %131 = arith.subf %121, %130 : vector<8x128xf32>
    %132 = math.exp %131 : vector<8x128xf32>
    %133 = arith.subf %126, %130 : vector<8x128xf32>
    %134 = math.exp %133 : vector<8x128xf32>
    %135 = arith.addf %132, %134 : vector<8x128xf32>
    %136 = arith.subf %128, %130 : vector<8x128xf32>
    %137 = math.exp %136 : vector<8x128xf32>
    %138 = arith.addf %135, %137 : vector<8x128xf32>
    %139 = math.log %138 : vector<8x128xf32>
    %140 = arith.addf %130, %139 : vector<8x128xf32>
    %141 = arith.addf %140, %124 : vector<8x128xf32>
    %142 = arith.sitofp %c4_i32 : i32 to f32
    %143 = arith.addf %12, %142 : f32
    %144 = vector.broadcast %143 : f32 to vector<8x1xf32>
    %145 = arith.cmpf olt, %144, %7 : vector<8x1xf32>
    %146 = vector.shape_cast %145 : vector<8x1xi1> to vector<8x1xi1>
    %147 = vector.broadcast %146 : vector<8x1xi1> to vector<8x128xi1>
    %148 = arith.select %147, %141, %121 : vector<8x128xi1>, vector<8x128xf32>
    %c5_i32 = arith.constant 5 : i32
    %149 = arith.index_cast %c5_i32 : i32 to index
    %c0_29 = arith.constant 0 : index
    %c0_30 = arith.constant 0 : index
    %150 = vector.load %arg3[%149, %c0_29, %c0_30] : memref<8x8x128xf32, #tpu.memory_space<vmem>>, vector<1x8x128xf32>
    %151 = vector.shape_cast %150 : vector<1x8x128xf32> to vector<8x128xf32>
    %c1_i32_31 = arith.constant 1 : i32
    %152 = tpu.dynamic_rotate %148 by %c1_i32_31 dim 1 : vector<8x128xf32>, i32 -> vector<8x128xf32>
    %153 = arith.addf %152, %5 : vector<8x128xf32>
    %c2_i32_32 = arith.constant 2 : i32
    %154 = tpu.dynamic_rotate %148 by %c2_i32_32 dim 1 : vector<8x128xf32>, i32 -> vector<8x128xf32>
    %155 = arith.addf %154, %6 : vector<8x128xf32>
    %156 = arith.maximumf %148, %153 : vector<8x128xf32>
    %157 = arith.maximumf %156, %155 : vector<8x128xf32>
    %158 = arith.subf %148, %157 : vector<8x128xf32>
    %159 = math.exp %158 : vector<8x128xf32>
    %160 = arith.subf %153, %157 : vector<8x128xf32>
    %161 = math.exp %160 : vector<8x128xf32>
    %162 = arith.addf %159, %161 : vector<8x128xf32>
    %163 = arith.subf %155, %157 : vector<8x128xf32>
    %164 = math.exp %163 : vector<8x128xf32>
    %165 = arith.addf %162, %164 : vector<8x128xf32>
    %166 = math.log %165 : vector<8x128xf32>
    %167 = arith.addf %157, %166 : vector<8x128xf32>
    %168 = arith.addf %167, %151 : vector<8x128xf32>
    %169 = arith.sitofp %c5_i32 : i32 to f32
    %170 = arith.addf %12, %169 : f32
    %171 = vector.broadcast %170 : f32 to vector<8x1xf32>
    %172 = arith.cmpf olt, %171, %7 : vector<8x1xf32>
    %173 = vector.shape_cast %172 : vector<8x1xi1> to vector<8x1xi1>
    %174 = vector.broadcast %173 : vector<8x1xi1> to vector<8x128xi1>
    %175 = arith.select %174, %168, %148 : vector<8x128xi1>, vector<8x128xf32>
    %c6_i32 = arith.constant 6 : i32
    %176 = arith.index_cast %c6_i32 : i32 to index
    %c0_33 = arith.constant 0 : index
    %c0_34 = arith.constant 0 : index
    %177 = vector.load %arg3[%176, %c0_33, %c0_34] : memref<8x8x128xf32, #tpu.memory_space<vmem>>, vector<1x8x128xf32>
    %178 = vector.shape_cast %177 : vector<1x8x128xf32> to vector<8x128xf32>
    %c1_i32_35 = arith.constant 1 : i32
    %179 = tpu.dynamic_rotate %175 by %c1_i32_35 dim 1 : vector<8x128xf32>, i32 -> vector<8x128xf32>
    %180 = arith.addf %179, %5 : vector<8x128xf32>
    %c2_i32_36 = arith.constant 2 : i32
    %181 = tpu.dynamic_rotate %175 by %c2_i32_36 dim 1 : vector<8x128xf32>, i32 -> vector<8x128xf32>
    %182 = arith.addf %181, %6 : vector<8x128xf32>
    %183 = arith.maximumf %175, %180 : vector<8x128xf32>
    %184 = arith.maximumf %183, %182 : vector<8x128xf32>
    %185 = arith.subf %175, %184 : vector<8x128xf32>
    %186 = math.exp %185 : vector<8x128xf32>
    %187 = arith.subf %180, %184 : vector<8x128xf32>
    %188 = math.exp %187 : vector<8x128xf32>
    %189 = arith.addf %186, %188 : vector<8x128xf32>
    %190 = arith.subf %182, %184 : vector<8x128xf32>
    %191 = math.exp %190 : vector<8x128xf32>
    %192 = arith.addf %189, %191 : vector<8x128xf32>
    %193 = math.log %192 : vector<8x128xf32>
    %194 = arith.addf %184, %193 : vector<8x128xf32>
    %195 = arith.addf %194, %178 : vector<8x128xf32>
    %196 = arith.sitofp %c6_i32 : i32 to f32
    %197 = arith.addf %12, %196 : f32
    %198 = vector.broadcast %197 : f32 to vector<8x1xf32>
    %199 = arith.cmpf olt, %198, %7 : vector<8x1xf32>
    %200 = vector.shape_cast %199 : vector<8x1xi1> to vector<8x1xi1>
    %201 = vector.broadcast %200 : vector<8x1xi1> to vector<8x128xi1>
    %202 = arith.select %201, %195, %175 : vector<8x128xi1>, vector<8x128xf32>
    %c7_i32 = arith.constant 7 : i32
    %203 = arith.index_cast %c7_i32 : i32 to index
    %c0_37 = arith.constant 0 : index
    %c0_38 = arith.constant 0 : index
    %204 = vector.load %arg3[%203, %c0_37, %c0_38] : memref<8x8x128xf32, #tpu.memory_space<vmem>>, vector<1x8x128xf32>
    %205 = vector.shape_cast %204 : vector<1x8x128xf32> to vector<8x128xf32>
    %c1_i32_39 = arith.constant 1 : i32
    %206 = tpu.dynamic_rotate %202 by %c1_i32_39 dim 1 : vector<8x128xf32>, i32 -> vector<8x128xf32>
    %207 = arith.addf %206, %5 : vector<8x128xf32>
    %c2_i32_40 = arith.constant 2 : i32
    %208 = tpu.dynamic_rotate %202 by %c2_i32_40 dim 1 : vector<8x128xf32>, i32 -> vector<8x128xf32>
    %209 = arith.addf %208, %6 : vector<8x128xf32>
    %210 = arith.maximumf %202, %207 : vector<8x128xf32>
    %211 = arith.maximumf %210, %209 : vector<8x128xf32>
    %212 = arith.subf %202, %211 : vector<8x128xf32>
    %213 = math.exp %212 : vector<8x128xf32>
    %214 = arith.subf %207, %211 : vector<8x128xf32>
    %215 = math.exp %214 : vector<8x128xf32>
    %216 = arith.addf %213, %215 : vector<8x128xf32>
    %217 = arith.subf %209, %211 : vector<8x128xf32>
    %218 = math.exp %217 : vector<8x128xf32>
    %219 = arith.addf %216, %218 : vector<8x128xf32>
    %220 = math.log %219 : vector<8x128xf32>
    %221 = arith.addf %211, %220 : vector<8x128xf32>
    %222 = arith.addf %221, %205 : vector<8x128xf32>
    %223 = arith.sitofp %c7_i32 : i32 to f32
    %224 = arith.addf %12, %223 : f32
    %225 = vector.broadcast %224 : f32 to vector<8x1xf32>
    %226 = arith.cmpf olt, %225, %7 : vector<8x1xf32>
    %227 = vector.shape_cast %226 : vector<8x1xi1> to vector<8x1xi1>
    %228 = vector.broadcast %227 : vector<8x1xi1> to vector<8x128xi1>
    %229 = arith.select %228, %222, %202 : vector<8x128xi1>, vector<8x128xf32>
    %c8_i32_41 = arith.constant 8 : i32
    %c0_42 = arith.constant 0 : index
    %c0_43 = arith.constant 0 : index
    %230 = vector.load %arg7[%c0_42, %c0_43] : memref<8x128xf32, #tpu.memory_space<vmem>>, vector<8x128xf32>
    tpu.vector_store %arg7[%c0_42, %c0_43], %229 {strides = array<i32>} : memref<8x128xf32, #tpu.memory_space<vmem>>, vector<8x128xf32>,
    %c0_i32_44 = arith.constant 0 : i32
    %231 = arith.cmpi eq, %arg1, %c0_i32_44 : i32
    %232 = arith.extui %231 : i1 to i32
    %c0_i32_45 = arith.constant 0 : i32
    %233 = arith.cmpi ne, %232, %c0_i32_45 : i32
    scf.if %233 {
      %c0_46 = arith.constant 0 : index
      %c0_47 = arith.constant 0 : index
      %234 = vector.load %arg5[%c0_46, %c0_47] : memref<8x128xf32, #tpu.memory_space<vmem>>, vector<8x128xf32>
      %235 = arith.addf %229, %234 : vector<8x128xf32>
      %cst_48 = arith.constant dense<0xFF800000> : vector<8xf32>
      %236 = vector.multi_reduction <maximumf>, %235, %cst_48 [1] : vector<8x128xf32> to vector<8xf32>
      %237 = vector.shape_cast %236 : vector<8xf32> to vector<8x1xf32>
      %238 = vector.broadcast %237 : vector<8x1xf32> to vector<8x128xf32>
      %239 = arith.subf %235, %238 : vector<8x128xf32>
      %240 = math.exp %239 : vector<8x128xf32>
      %cst_49 = arith.constant dense<0.000000e+00> : vector<8xf32>
      %241 = vector.multi_reduction <add>, %240, %cst_49 [1] : vector<8x128xf32> to vector<8xf32>
      %242 = vector.shape_cast %241 : vector<8xf32> to vector<8x1xf32>
      %243 = math.log %242 : vector<8x1xf32>
      %244 = arith.addf %237, %243 : vector<8x1xf32>
      %245 = vector.shape_cast %244 : vector<8x1xf32> to vector<8x1xf32>
      %246 = vector.broadcast %245 : vector<8x1xf32> to vector<8x128xf32>
      %c0_50 = arith.constant 0 : index
      %c0_51 = arith.constant 0 : index
      %247 = vector.load %arg6[%c0_50, %c0_51] : memref<8x128xf32, #tpu.memory_space<vmem>>, vector<8x128xf32>
      tpu.vector_store %arg6[%c0_50, %c0_51], %246 {strides = array<i32>} : memref<8x128xf32, #tpu.memory_space<vmem>>, vector<8x128xf32>,
    } else {
    }
    return
  }
  func.func @transform_0(%arg0: i32, %arg1: i32) -> (i32, i32) {
    %c0_i32 = arith.constant 0 : i32
    %c0_i32_0 = arith.constant 0 : i32
    return %arg0, %c0_i32 : i32, i32
  }
  func.func @transform_1(%arg0: i32, %arg1: i32) -> (i32, i32, i32) {
    %c0_i32 = arith.constant 0 : i32
    %c0_i32_0 = arith.constant 0 : i32
    return %arg1, %arg0, %c0_i32 : i32, i32, i32
  }
  func.func @transform_2(%arg0: i32, %arg1: i32) -> (i32, i32) {
    %c0_i32 = arith.constant 0 : i32
    %c0_i32_0 = arith.constant 0 : i32
    return %arg0, %c0_i32 : i32, i32
  }
  func.func @transform_3(%arg0: i32, %arg1: i32) -> (i32, i32) {
    %c0_i32 = arith.constant 0 : i32
    %c0_i32_0 = arith.constant 0 : i32
    return %arg0, %c0_i32 : i32, i32
  }
  func.func @transform_4(%arg0: i32, %arg1: i32) -> (i32, i32) {
    %c0_i32 = arith.constant 0 : i32
    %c0_i32_0 = arith.constant 0 : i32
    return %arg0, %c0_i32 : i32, i32
  }
}

</mosaic_0001>

<llo_original>
// kernel: tpu_custom_call.1
$region0: #{tpu_custom_call.1}
  #allocation0 [shape = 'u32[]', space=smem, size = 0x4, offset = 0x4, fixed_abs, tag = 'smem constant byte address 0x4 - core index']
  #allocation1 [shape = 'u32[72,128]{1,0:T(1,128)}', space=vmem, size = 0x9000, scoped, tag = 'internal scratch']
  #allocation2 [shape = 'f32[8,128]{1,0:T(8,128)}', space=vmem, size = 0x1000, scoped, tag = 'scratch operand']
  %s0 = inlined_call_operand.vmem [shape: f32[8,1], index: 0, kind: input, shape index: {}]
  %s1 = inlined_call_operand.hbm [shape: f32[8,8,128], index: 1, kind: input, shape index: {}]
  %s2 = inlined_call_operand.vmem [shape: f32[8,128], index: 2, kind: input, shape index: {}]
  %s3 = inlined_call_operand.hbm [shape: f32[8,128], index: 3, kind: input, shape index: {}]
  %s4 = inlined_call_operand.hbm [shape: f32[8,128], index: 4, kind: output, shape index: {}]
  %s5 = sld [smem:[#allocation0]]
  $region42: #{tpu_custom_call.1} parent=0
    _
  %s7 = ssub.s32 1, %s5
  %s8 = scalar_select 0, %s7, %s5
  $region1: #{tpu_custom_call.1} parent=0
    #allocation3 [shape = 'u8[32768]{0}', space=vmem, size = 0x8000, scoped, tag = 'input window, operand 1, single buffered']
    #allocation4 [shape = 's32[1]{0}', space=sflag, size = 0x4, scoped, tag = 'scoped memory for tpu_custom_call.1']
    #allocation5 [shape = 's32[1]{0}', space=sflag, size = 0x4, scoped, tag = 'scoped memory for tpu_custom_call.1']
    #allocation6 [shape = 'u8[4096]{0}', space=vmem, size = 0x1000, scoped, tag = 'input window, operand 3, single buffered']
    #allocation7 [shape = 's32[1]{0}', space=sflag, size = 0x4, scoped, tag = 'scoped memory for tpu_custom_call.1']
    #allocation8 [shape = 'u8[4096]{0}', space=vmem, size = 0x1000, scoped, tag = 'output window, operand 0, single buffered']
    %9 = vsyncpa [#allocation4], 0
    %10 = vsyncpa [#allocation7], 0
    %11 = vsyncpa [#allocation5], 0
    // Predicated region
    $region2: #{tpu_custom_call.1} parent=1 // pred_check
      _
    $region3: #{tpu_custom_call.1} parent=1 // pred_check_branch
      %13 = sbr.rel (0) target = $region5
    $region4: #{tpu_custom_call.1} parent=1 // pred_region
      _
    $region5: #{tpu_custom_call.1} parent=1 // pred_fallthru
      _
    // Predicated region
    $region6: #{tpu_custom_call.1} parent=1 // pred_check
      _
    $region7: #{tpu_custom_call.1} parent=1 // pred_check_branch
      %15 = sbr.rel (0) target = $region9
    $region8: #{tpu_custom_call.1} parent=1 // pred_region
      %17 = vsyncadd [#allocation4], 0
      %s18 = sshll.u32 %s1, 4
      %s19 = int_to_ptr.hbm [resolvable:$true] %s18
      %s20 = sshll.u32 [#allocation3], 4
      %s21 = int_to_ptr.vmem [resolvable:$true] %s20
      %26 = dma.hbm_to_vmem [thread:$0]  %s19, 1024, %s21, [#allocation4], 128, 128, 8
    $region9: #{tpu_custom_call.1} parent=1 // pred_fallthru
      _
    // Predicated region
    $region10: #{tpu_custom_call.1} parent=1 // pred_check
      _
    $region11: #{tpu_custom_call.1} parent=1 // pred_check_branch
      %28 = sbr.rel (0) target = $region13
    $region12: #{tpu_custom_call.1} parent=1 // pred_region
      _
    $region13: #{tpu_custom_call.1} parent=1 // pred_fallthru
      _
    // Predicated region
    $region14: #{tpu_custom_call.1} parent=1 // pred_check
      _
    $region15: #{tpu_custom_call.1} parent=1 // pred_check_branch
      %30 = sbr.rel (0) target = $region17
    $region16: #{tpu_custom_call.1} parent=1 // pred_region
      %32 = vsyncadd [#allocation7], 0
      %s34 = sshll.u32 %s3, 4
      %s35 = int_to_ptr.hbm [resolvable:$true] %s34
      %s36 = sshll.u32 [#allocation6], 4
      %s37 = int_to_ptr.vmem [resolvable:$true] %s36
      %39 = dma.hbm_to_vmem [thread:$0]  %s35, 128, %s37, [#allocation7]
    $region17: #{tpu_custom_call.1} parent=1 // pred_fallthru
      _
    // Predicated region
    $region18: #{tpu_custom_call.1} parent=1 // pred_check
      _
    $region19: #{tpu_custom_call.1} parent=1 // pred_check_branch
      %41 = sbr.rel (0) target = $region21
    $region20: #{tpu_custom_call.1} parent=1 // pred_region
      %43 = dma.done [#allocation4], 1024
    $region21: #{tpu_custom_call.1} parent=1 // pred_fallthru
      _
    // Predicated region
    $region22: #{tpu_custom_call.1} parent=1 // pred_check
      _
    $region23: #{tpu_custom_call.1} parent=1 // pred_check_branch
      %45 = sbr.rel (0) target = $region25
    $region24: #{tpu_custom_call.1} parent=1 // pred_region
      %47 = dma.done [#allocation7], 128
    $region25: #{tpu_custom_call.1} parent=1 // pred_fallthru
      _
    %v48 = vlaneseq
    %v49 = vand.u32 %v48, 127
    %vm50 = vcmp.ge.s32.totalorder %v49, 1
    %v51 = vsel %vm50, 0.0, -1e+30
    %v52 = vld [vmem:[%s2] sm:$0xff]
    %v53 = vld [vmem:[%s0] sm:$0xff]
    %p54 = scmp.eq.s32.totalorder 0, 0
    // Predicated region
    $region26: #{tpu_custom_call.1} parent=1 // pred_check
      %p55 = pneg %p54
    $region27: #{tpu_custom_call.1} parent=1 // pred_check_branch
      %57 = sbr.rel (%p55) target = $region29
    $region28: #{tpu_custom_call.1} parent=1 // pred_region
      %vm58 = vcmp.eq.s32.totalorder %v49, 0
      %v59 = vsel %vm58, 0.0, -1e+30
      %60 = vst [vmem:[#allocation2] sm:$0xff] %v59
    $region29: #{tpu_custom_call.1} parent=1 // pred_fallthru
      _
    %s61 = smul.u32 0, 8
    %s62 = scvt.s32.f32 %s61
    %v63 = vld [vmem:[#allocation2] sm:$0xff]
    %v64 = vld [vmem:[#allocation3] sm:$0xff]
    %65 = vrot.lane.b32.xlu0 %v63, 1
    %v66 = vpop.permute.xlu0 %65
    %v67 = vadd.f32 %v66, %v51
    %68 = vrot.lane.b32.xlu0 %v63, 2
    %v69 = vpop.permute.xlu0 %68
    %v70 = vadd.f32 %v69, %v52
    %v71 = vmax.f32 %v63, %v67
    %v72 = vmax.f32 %v71, %v70
    %v73 = vsub.f32 %v63, %v72
    %v74 = vmul.f32 %v73, 1.442695
    %v75 = vpow.pop %v74
    %v76 = vsub.f32 %v67, %v72
    %v77 = vmul.f32 %v76, 1.442695
    %v78 = vpow.pop %v77
    %v79 = vadd.f32 %v75, %v78
    %v80 = vsub.f32 %v70, %v72
    %v81 = vmul.f32 %v80, 1.442695
    %v82 = vpow.pop %v81
    %v83 = vadd.f32 %v79, %v82
    %v84 = vlog2.pop %v83
    %v85 = vmul.f32 %v84, 0.6931472
    %v86 = vadd.f32 %v72, %v85
    %v87 = vadd.f32 %v86, %v64
    %s88 = sadd.f32 %s62, 0.0
    %v89 = vstv %s88
    %vm90 = vcmp.lt.f32.partialorder %v89, %v53
    %v91 = vsel %vm90, 1, 0
    %92 = vset.pattern.permute.xlu0 0
    %93 = vperm.xlu0 %92, %v91
    %v94 = vpop.permute.xlu0 %93
    %vm95 = vcmp.eq.s32.totalorder %v94, 1
    %v96 = vsel %vm95, %v87, %v63
    %s97 = scalar_lea.vmem [#allocation3], 8
    %v98 = vld [vmem:[%s97] sm:$0xff]
    %99 = vrot.lane.b32.xlu0 %v96, 1
    %v100 = vpop.permute.xlu0 %99
    %v101 = vadd.f32 %v100, %v51
    %102 = vrot.lane.b32.xlu0 %v96, 2
    %v103 = vpop.permute.xlu0 %102
    %v104 = vadd.f32 %v103, %v52
    %v105 = vmax.f32 %v96, %v101
    %v106 = vmax.f32 %v105, %v104
    %v107 = vsub.f32 %v96, %v106
    %v108 = vmul.f32 %v107, 1.442695
    %v109 = vpow.pop %v108
    %v110 = vsub.f32 %v101, %v106
    %v111 = vmul.f32 %v110, 1.442695
    %v112 = vpow.pop %v111
    %v113 = vadd.f32 %v109, %v112
    %v114 = vsub.f32 %v104, %v106
    %v115 = vmul.f32 %v114, 1.442695
    %v116 = vpow.pop %v115
    %v117 = vadd.f32 %v113, %v116
    %v118 = vlog2.pop %v117
    %v119 = vmul.f32 %v118, 0.6931472
    %v120 = vadd.f32 %v106, %v119
    %v121 = vadd.f32 %v120, %v98
    %s122 = sadd.f32 %s62, 1.0
    %v123 = vstv %s122
    %vm124 = vcmp.lt.f32.partialorder %v123, %v53
    %v125 = vsel %vm124, 1, 0
    %126 = vset.pattern.permute.xlu0 0
    %127 = vperm.xlu0 %126, %v125
    %v128 = vpop.permute.xlu0 %127
    %vm129 = vcmp.eq.s32.totalorder %v128, 1
    %v130 = vsel %vm129, %v121, %v96
    %s131 = scalar_lea.vmem [#allocation3], 16
    %v132 = vld [vmem:[%s131] sm:$0xff]
    %133 = vrot.lane.b32.xlu0 %v130, 1
    %v134 = vpop.permute.xlu0 %133
    %v135 = vadd.f32 %v134, %v51
    %136 = vrot.lane.b32.xlu0 %v130, 2
    %v137 = vpop.permute.xlu0 %136
    %v138 = vadd.f32 %v137, %v52
    %v139 = vmax.f32 %v130, %v135
    %v140 = vmax.f32 %v139, %v138
    %v141 = vsub.f32 %v130, %v140
    %v142 = vmul.f32 %v141, 1.442695
    %v143 = vpow.pop %v142
    %v144 = vsub.f32 %v135, %v140
    %v145 = vmul.f32 %v144, 1.442695
    %v146 = vpow.pop %v145
    %v147 = vadd.f32 %v143, %v146
    %v148 = vsub.f32 %v138, %v140
    %v149 = vmul.f32 %v148, 1.442695
    %v150 = vpow.pop %v149
    %v151 = vadd.f32 %v147, %v150
    %v152 = vlog2.pop %v151
    %v153 = vmul.f32 %v152, 0.6931472
    %v154 = vadd.f32 %v140, %v153
    %v155 = vadd.f32 %v154, %v132
    %s156 = sadd.f32 %s62, 2.0
    %v157 = vstv %s156
    %vm158 = vcmp.lt.f32.partialorder %v157, %v53
    %v159 = vsel %vm158, 1, 0
    %160 = vset.pattern.permute.xlu0 0
    %161 = vperm.xlu0 %160, %v159
    %v162 = vpop.permute.xlu0 %161
    %vm163 = vcmp.eq.s32.totalorder %v162, 1
    %v164 = vsel %vm163, %v155, %v130
    %s165 = scalar_lea.vmem [#allocation3], 24
    %v166 = vld [vmem:[%s165] sm:$0xff]
    %167 = vrot.lane.b32.xlu0 %v164, 1
    %v168 = vpop.permute.xlu0 %167
    %v169 = vadd.f32 %v168, %v51
    %170 = vrot.lane.b32.xlu0 %v164, 2
    %v171 = vpop.permute.xlu0 %170
    %v172 = vadd.f32 %v171, %v52
    %v173 = vmax.f32 %v164, %v169
    %v174 = vmax.f32 %v173, %v172
    %v175 = vsub.f32 %v164, %v174
    %v176 = vmul.f32 %v175, 1.442695
    %v177 = vpow.pop %v176
    %v178 = vsub.f32 %v169, %v174
    %v179 = vmul.f32 %v178, 1.442695
    %v180 = vpow.pop %v179
    %v181 = vadd.f32 %v177, %v180
    %v182 = vsub.f32 %v172, %v174
    %v183 = vmul.f32 %v182, 1.442695
    %v184 = vpow.pop %v183
    %v185 = vadd.f32 %v181, %v184
    %v186 = vlog2.pop %v185
    %v187 = vmul.f32 %v186, 0.6931472
    %v188 = vadd.f32 %v174, %v187
    %v189 = vadd.f32 %v188, %v166
    %s190 = sadd.f32 %s62, 3.0
    %v191 = vstv %s190
    %vm192 = vcmp.lt.f32.partialorder %v191, %v53
    %v193 = vsel %vm192, 1, 0
    %194 = vset.pattern.permute.xlu0 0
    %195 = vperm.xlu0 %194, %v193
    %v196 = vpop.permute.xlu0 %195
    %vm197 = vcmp.eq.s32.totalorder %v196, 1
    %v198 = vsel %vm197, %v189, %v164
    %s199 = scalar_lea.vmem [#allocation3], 32
    %v200 = vld [vmem:[%s199] sm:$0xff]
    %201 = vrot.lane.b32.xlu0 %v198, 1
    %v202 = vpop.permute.xlu0 %201
    %v203 = vadd.f32 %v202, %v51
    %204 = vrot.lane.b32.xlu0 %v198, 2
    %v205 = vpop.permute.xlu0 %204
    %v206 = vadd.f32 %v205, %v52
    %v207 = vmax.f32 %v198, %v203
    %v208 = vmax.f32 %v207, %v206
    %v209 = vsub.f32 %v198, %v208
    %v210 = vmul.f32 %v209, 1.442695
    %v211 = vpow.pop %v210
    %v212 = vsub.f32 %v203, %v208
    %v213 = vmul.f32 %v212, 1.442695
    %v214 = vpow.pop %v213
    %v215 = vadd.f32 %v211, %v214
    %v216 = vsub.f32 %v206, %v208
    %v217 = vmul.f32 %v216, 1.442695
    %v218 = vpow.pop %v217
    %v219 = vadd.f32 %v215, %v218
    %v220 = vlog2.pop %v219
    %v221 = vmul.f32 %v220, 0.6931472
    %v222 = vadd.f32 %v208, %v221
    %v223 = vadd.f32 %v222, %v200
    %s224 = sadd.f32 %s62, 4.0
    %v225 = vstv %s224
    %vm226 = vcmp.lt.f32.partialorder %v225, %v53
    %v227 = vsel %vm226, 1, 0
    %228 = vset.pattern.permute.xlu0 0
    %229 = vperm.xlu0 %228, %v227
    %v230 = vpop.permute.xlu0 %229
    %vm231 = vcmp.eq.s32.totalorder %v230, 1
    %v232 = vsel %vm231, %v223, %v198
    %s233 = scalar_lea.vmem [#allocation3], 40
    %v234 = vld [vmem:[%s233] sm:$0xff]
    %235 = vrot.lane.b32.xlu0 %v232, 1
    %v236 = vpop.permute.xlu0 %235
    %v237 = vadd.f32 %v236, %v51
    %238 = vrot.lane.b32.xlu0 %v232, 2
    %v239 = vpop.permute.xlu0 %238
    %v240 = vadd.f32 %v239, %v52
    %v241 = vmax.f32 %v232, %v237
    %v242 = vmax.f32 %v241, %v240
    %v243 = vsub.f32 %v232, %v242
    %v244 = vmul.f32 %v243, 1.442695
    %v245 = vpow.pop %v244
    %v246 = vsub.f32 %v237, %v242
    %v247 = vmul.f32 %v246, 1.442695
    %v248 = vpow.pop %v247
    %v249 = vadd.f32 %v245, %v248
    %v250 = vsub.f32 %v240, %v242
    %v251 = vmul.f32 %v250, 1.442695
    %v252 = vpow.pop %v251
    %v253 = vadd.f32 %v249, %v252
    %v254 = vlog2.pop %v253
    %v255 = vmul.f32 %v254, 0.6931472
    %v256 = vadd.f32 %v242, %v255
    %v257 = vadd.f32 %v256, %v234
    %s258 = sadd.f32 %s62, 5.0
    %v259 = vstv %s258
    %vm260 = vcmp.lt.f32.partialorder %v259, %v53
    %v261 = vsel %vm260, 1, 0
    %262 = vset.pattern.permute.xlu0 0
    %263 = vperm.xlu0 %262, %v261
    %v264 = vpop.permute.xlu0 %263
    %vm265 = vcmp.eq.s32.totalorder %v264, 1
    %v266 = vsel %vm265, %v257, %v232
    %s267 = scalar_lea.vmem [#allocation3], 48
    %v268 = vld [vmem:[%s267] sm:$0xff]
    %269 = vrot.lane.b32.xlu0 %v266, 1
    %v270 = vpop.permute.xlu0 %269
    %v271 = vadd.f32 %v270, %v51
    %272 = vrot.lane.b32.xlu0 %v266, 2
    %v273 = vpop.permute.xlu0 %272
    %v274 = vadd.f32 %v273, %v52
    %v275 = vmax.f32 %v266, %v271
    %v276 = vmax.f32 %v275, %v274
    %v277 = vsub.f32 %v266, %v276
    %v278 = vmul.f32 %v277, 1.442695
    %v279 = vpow.pop %v278
    %v280 = vsub.f32 %v271, %v276
    %v281 = vmul.f32 %v280, 1.442695
    %v282 = vpow.pop %v281
    %v283 = vadd.f32 %v279, %v282
    %v284 = vsub.f32 %v274, %v276
    %v285 = vmul.f32 %v284, 1.442695
    %v286 = vpow.pop %v285
    %v287 = vadd.f32 %v283, %v286
    %v288 = vlog2.pop %v287
    %v289 = vmul.f32 %v288, 0.6931472
    %v290 = vadd.f32 %v276, %v289
    %v291 = vadd.f32 %v290, %v268
    %s292 = sadd.f32 %s62, 6.0
    %v293 = vstv %s292
    %vm294 = vcmp.lt.f32.partialorder %v293, %v53
    %v295 = vsel %vm294, 1, 0
    %296 = vset.pattern.permute.xlu0 0
    %297 = vperm.xlu0 %296, %v295
    %v298 = vpop.permute.xlu0 %297
    %vm299 = vcmp.eq.s32.totalorder %v298, 1
    %v300 = vsel %vm299, %v291, %v266
    %s301 = scalar_lea.vmem [#allocation3], 56
    %v302 = vld [vmem:[%s301] sm:$0xff]
    %303 = vrot.lane.b32.xlu0 %v300, 1
    %v304 = vpop.permute.xlu0 %303
    %v305 = vadd.f32 %v304, %v51
    %306 = vrot.lane.b32.xlu0 %v300, 2
    %v307 = vpop.permute.xlu0 %306
    %v308 = vadd.f32 %v307, %v52
    %v309 = vmax.f32 %v300, %v305
    %v310 = vmax.f32 %v309, %v308
    %v311 = vsub.f32 %v300, %v310
    %v312 = vmul.f32 %v311, 1.442695
    %v313 = vpow.pop %v312
    %v314 = vsub.f32 %v305, %v310
    %v315 = vmul.f32 %v314, 1.442695
    %v316 = vpow.pop %v315
    %v317 = vadd.f32 %v313, %v316
    %v318 = vsub.f32 %v308, %v310
    %v319 = vmul.f32 %v318, 1.442695
    %v320 = vpow.pop %v319
    %v321 = vadd.f32 %v317, %v320
    %v322 = vlog2.pop %v321
    %v323 = vmul.f32 %v322, 0.6931472
    %v324 = vadd.f32 %v310, %v323
    %v325 = vadd.f32 %v324, %v302
    %s326 = sadd.f32 %s62, 7.0
    %v327 = vstv %s326
    %vm328 = vcmp.lt.f32.partialorder %v327, %v53
    %v329 = vsel %vm328, 1, 0
    %330 = vset.pattern.permute.xlu0 0
    %331 = vperm.xlu0 %330, %v329
    %v332 = vpop.permute.xlu0 %331
    %vm333 = vcmp.eq.s32.totalorder %v332, 1
    %v334 = vsel %vm333, %v325, %v300
    %335 = vst [vmem:[#allocation2] sm:$0xff] %v334
    // Predicated region
    $region30: #{tpu_custom_call.1} parent=1 // pred_check
      %p336 = pneg %p54
    $region31: #{tpu_custom_call.1} parent=1 // pred_check_branch
      %338 = sbr.rel (%p336) target = $region33
    $region32: #{tpu_custom_call.1} parent=1 // pred_region
      %v339 = vld [vmem:[#allocation6] sm:$0xff]
      %v340 = vadd.f32 %v334, %v339
      %341 = vmax.xlane.f32.xlu0 %v340
      %v342 = vpop.xlane.xlu0 %341
      %v343 = vsub.f32 %v340, %v342
      %v344 = vmul.f32 %v343, 1.442695
      %v345 = vpow.pop %v344
      %346 = vadd.xlane.f32.xlu0 %v345
      %v347 = vpop.xlane.xlu0 %346
      %v348 = vlog2.pop %v347
      %v349 = vmul.f32 %v348, 0.6931472
      %v350 = vadd.f32 %v342, %v349
      %351 = vst [vmem:[#allocation8] sm:$0xff] %v350
    $region33: #{tpu_custom_call.1} parent=1 // pred_fallthru
      _
    // Predicated region
    $region34: #{tpu_custom_call.1} parent=1 // pred_check
      _
    $region35: #{tpu_custom_call.1} parent=1 // pred_check_branch
      %353 = sbr.rel (0) target = $region37
    $region36: #{tpu_custom_call.1} parent=1 // pred_region
      %355 = vsyncadd [#allocation5], 0
      %s357 = sshll.u32 [#allocation8], 4
      %s358 = int_to_ptr.vmem [resolvable:$true] %s357
      %s359 = sshll.u32 %s4, 4
      %s360 = int_to_ptr.hbm [resolvable:$true] %s359
      %362 = dma.vmem_to_hbm [thread:$0]  %s358, 128, %s360, [#allocation5]
    $region37: #{tpu_custom_call.1} parent=1 // pred_fallthru
      _
    // Predicated region
    $region38: #{tpu_custom_call.1} parent=1 // pred_check
      _
    $region39: #{tpu_custom_call.1} parent=1 // pred_check_branch
      %364 = sbr.rel (0) target = $region41
    $region40: #{tpu_custom_call.1} parent=1 // pred_region
      %366 = dma.done [#allocation5], 128
    $region41: #{tpu_custom_call.1} parent=1 // pred_fallthru
      _
    %367 = vsyncpa [#allocation4], 1
    %368 = vsyncpa [#allocation7], 1
    %369 = vsyncpa [#allocation5], 1

</llo_original>
